<compile_context>
chip_gen: v6e
topology: v6e:2x2x1
jax: 0.10.0
libtpu: 0.0.40
codegen_flags: <defaults>
</compile_context>

<pallas_src>
import math

import jax
import jax.numpy as jnp
from jax.experimental import pallas as pl
from jax.experimental.pallas import tpu as pltpu


def _round_up(n, m):
    return ((n + m - 1) // m) * m


def _make_kernel(period, r_phase, t_blk, nc):
    """Kernel for one (b_blk, t_blk) -> (b_blk, t_blk*period) tile."""
    w = t_blk * period

    def kernel(x_ref, o_ref):
        if period == 1:
            # Pure copy (r_phase is necessarily 0).
            o_ref[...] = x_ref[...].astype(o_ref.dtype)
            return

        x = x_ref[...]
        b_rows = x.shape[0]
        # Static unrolled loop over lane-dense output chunks of this tile.
        for off in range(0, w, nc):
            cols = min(nc, w - off)
            # Local source times feeding output columns [off, off+cols):
            #   column = t*period + r_phase
            t_lo = max(0, -(-(off - r_phase) // period))            # ceil
            t_hi = min(t_blk - 1, (off + cols - 1 - r_phase) // period)
            if t_hi < t_lo:
                o_ref[:, off:off + cols] = jnp.zeros(
                    (b_rows, cols), o_ref.dtype)
                continue
            k = t_hi - t_lo + 1
            xs = x[:, t_lo:t_lo + k]                                 # (b, k)
            col = jax.lax.broadcasted_iota(jnp.int32, (k, cols), 1) + off
            row = jax.lax.broadcasted_iota(jnp.int32, (k, cols), 0) + t_lo
            # 0/1 selection slab, generated in-register (no HBM traffic).
            m = (col == row * period + r_phase).astype(x.dtype)      # (k, cols)
            o_ref[:, off:off + cols] = jnp.dot(
                xs, m, preferred_element_type=jnp.float32
            ).astype(o_ref.dtype)

    return kernel


def interpolate(x, period, start=0, dim=-1):
    """Pallas equivalent of Interpolation(period, start).forward(x, dim)."""
    assert 1 <= period
    assert 0 <= start

    x_moved = jnp.moveaxis(x, dim, -1)
    lead = x_moved.shape[:-1]
    T = x_moved.shape[-1]
    T_out = T * period + start

    B = math.prod(lead) if lead else 1
    x2d = x_moved.reshape(B, T)

    orig_dtype = x.dtype
    work_dtype = orig_dtype if jnp.issubdtype(orig_dtype, jnp.floating) \
        else jnp.float32
    # TODO(synk): integer inputs with |x| > 2^24 would lose precision through
    # the float32 MXU path; such inputs are not expected for this module.
    if work_dtype != orig_dtype:
        x2d = x2d.astype(work_dtype)

    # Fold `start` into a phase r < period plus a q-group left shift.
    q, r = divmod(start, period)
    Tq = T + q
    Tq_need = Tq + (1 if r > 0 else 0)   # ensures Tq_pad*period >= T_out

    # Time tiling: 128-wide lane-dense tiles for real workloads, a single
    # full-width block for tiny inputs.
    if Tq_need >= 128:
        t_blk = 128
        Tq_pad = _round_up(Tq_need, t_blk)
    else:
        t_blk = max(8, _round_up(Tq_need, 8))
        Tq_pad = t_blk

    # Row tiling: keep double-buffered in+out tiles under ~8 MiB.
    itemsize = jnp.dtype(work_dtype).itemsize
    if B >= 8:
        budget = 8 * 1024 * 1024
        max_rows = max(8, (budget // (2 * t_blk * (1 + period) * itemsize))
                       // 8 * 8)
        b_blk = max(8, min(256, max_rows, _round_up(B, 8)))
        B_pad = _round_up(B, b_blk)
    else:
        b_blk = B
        B_pad = B

    # Pad: q zero groups on the left of time, then up to full tiles.
    xp = jnp.pad(x2d, ((0, B_pad - B), (q, Tq_pad - Tq)))

    W_out_pad = Tq_pad * period
    # Output chunk width inside the kernel: multiple of 128 lanes, at most
    # ~16 chunks per tile regardless of period.
    nc = min(128 * max(1, -(-period // 16)), t_blk * period)

    kernel = _make_kernel(period, r, t_blk, nc)

    y_pad = pl.pallas_call(
        kernel,
        out_shape=jax.ShapeDtypeStruct((B_pad, W_out_pad), work_dtype),
        grid=(B_pad // b_blk, Tq_pad // t_blk),
        in_specs=[pl.BlockSpec((b_blk, t_blk), lambda i, j: (i, j))],
        out_specs=pl.BlockSpec((b_blk, t_blk * period), lambda i, j: (i, j)),
        compiler_params=pltpu.CompilerParams(
            dimension_semantics=("parallel", "parallel"),
            vmem_limit_bytes=32 * 1024 * 1024,
        ),
    )(xp)

    y2d = y_pad[:B, :T_out].astype(orig_dtype)
    y = y2d.reshape(lead + (T_out,))
    return jnp.moveaxis(y, -1, dim)


def _reference(x, period, start, dim=-1):
    """Pure-JAX reference mirroring torch's zeros + index_add_."""
    T_out = x.shape[dim] * period + start
    indices = jnp.arange(start, T_out, period)
    x_moved = jnp.moveaxis(x, dim, -1)
    y_moved = jnp.zeros(x_moved.shape[:-1] + (T_out,), dtype=x.dtype)
    y_moved = y_moved.at[..., indices].add(x_moved)
    return jnp.moveaxis(y_moved, -1, dim)


if __name__ == "__main__":
    key = jax.random.PRNGKey(0)
    k1, k2 = jax.random.split(key)

    # Case 1: last-dim interpolation, start < period (tiny-T single-tile path).
    x1 = jax.random.normal(k1, (2, 4, 16), dtype=jnp.float32)
    y1 = jax.block_until_ready(interpolate(x1, 3, 1, dim=-1))
    r1 = _reference(x1, 3, 1, dim=-1)
    assert y1.shape == (2, 4, 16 * 3 + 1), y1.shape
    assert jnp.allclose(y1, r1, rtol=1e-6, atol=1e-6), "case 1 mismatch"

    # Case 2: interior dim, start >= period (q-shift + 128-wide time tiling).
    x2 = jax.random.normal(k2, (2, 200, 4), dtype=jnp.float32)
    y2 = jax.block_until_ready(interpolate(x2, 2, 5, dim=1))
    r2 = _reference(x2, 2, 5, dim=1)
    assert y2.shape == (2, 200 * 2 + 5, 4), y2.shape
    assert jnp.allclose(y2, r2, rtol=1e-6, atol=1e-6), "case 2 mismatch"

    # Case 3: docstring example (1-D integer input).
    x3 = jnp.arange(1, 4)
    y3 = jax.block_until_ready(interpolate(x3, 3, 1))
    expected3 = jnp.array([0, 1, 0, 0, 2, 0, 0, 3, 0, 0], dtype=x3.dtype)
    assert jnp.array_equal(y3, expected3), y3

    print("KERNEL_OK")
</pallas_src>

<mosaic_0001>
module attributes {stable_mosaic.version = 11 : i64} {
  func.func @kernel(%arg0: i32, %arg1: i32, %arg2: memref<8x24xf32, #tpu.memory_space<vmem>>, %arg3: memref<8x72xf32, #tpu.memory_space<vmem>>) attributes {dimension_semantics = [#tpu.dimension_semantics<parallel>, #tpu.dimension_semantics<parallel>], iteration_bounds = array<i64: 1, 1>, scalar_prefetch = 0 : i64, scratch_operands = 0 : i64, tpu.core_type = #tpu.core_type<tc>, window_params = [{transform_indices = @transform_0, window_bounds = array<i64: 8, 24>}, {transform_indices = @transform_1, window_bounds = array<i64: 8, 72>}]} {
    %c0 = arith.constant 0 : index
    %c0_0 = arith.constant 0 : index
    %0 = vector.load %arg2[%c0, %c0_0] : memref<8x24xf32, #tpu.memory_space<vmem>>, vector<8x24xf32>
    %1 = tpu.iota {dimensions = array<i32: 1>} : vector<24x72xi32>
    %c0_i32 = arith.constant 0 : i32
    %2 = vector.broadcast %c0_i32 : i32 to vector<24x72xi32>
    %3 = arith.addi %1, %2 : vector<24x72xi32>
    %4 = tpu.iota {dimensions = array<i32: 0>} : vector<24x72xi32>
    %c0_i32_1 = arith.constant 0 : i32
    %5 = vector.broadcast %c0_i32_1 : i32 to vector<24x72xi32>
    %6 = arith.addi %4, %5 : vector<24x72xi32>
    %c3_i32 = arith.constant 3 : i32
    %7 = vector.broadcast %c3_i32 : i32 to vector<24x72xi32>
    %8 = arith.muli %6, %7 : vector<24x72xi32>
    %c1_i32 = arith.constant 1 : i32
    %9 = vector.broadcast %c1_i32 : i32 to vector<24x72xi32>
    %10 = arith.addi %8, %9 : vector<24x72xi32>
    %11 = arith.cmpi eq, %3, %10 : vector<24x72xi32>
    %12 = arith.extui %11 : vector<24x72xi1> to vector<24x72xi32>
    %13 = arith.sitofp %12 : vector<24x72xi32> to vector<24x72xf32>
    %cst = arith.constant dense<0.000000e+00> : vector<8x72xf32>
    %14 = tpu.matmul %0, %13, %cst {dimension_numbers = #tpu.dot_dimension_numbers<[1], [0], [0], [1], [0, 0, 1, 1], [], []>} : vector<8x24xf32>, vector<24x72xf32>, vector<8x72xf32> -> vector<8x72xf32>
    %c0_2 = arith.constant 0 : index
    %c0_3 = arith.constant 0 : index
    %15 = vector.load %arg3[%c0_2, %c0_3] : memref<8x72xf32, #tpu.memory_space<vmem>>, vector<8x72xf32>
    tpu.vector_store %arg3[%c0_2, %c0_3], %14 {strides = array<i32>} : memref<8x72xf32, #tpu.memory_space<vmem>>, vector<8x72xf32>,
    return
  }
  func.func @transform_0(%arg0: i32, %arg1: i32) -> (i32, i32) {
    %c0_i32 = arith.constant 0 : i32
    return %arg0, %arg1 : i32, i32
  }
  func.func @transform_1(%arg0: i32, %arg1: i32) -> (i32, i32) {
    %c0_i32 = arith.constant 0 : i32
    return %arg0, %arg1 : i32, i32
  }
}

</mosaic_0001>

<llo_original>
// kernel: tpu_custom_call.1
$region0: #{tpu_custom_call.1}
  #allocation0 [shape = 'u32[]', space=smem, size = 0x4, offset = 0x4, fixed_abs, tag = 'smem constant byte address 0x4 - core index']
  #allocation1 [shape = 'u32[144,128]{1,0:T(1,128)}', space=vmem, size = 0x12000, scoped, tag = 'internal scratch']
  %s0 = inlined_call_operand.hbm [shape: f32[8,24], index: 0, kind: input, shape index: {}]
  %s1 = inlined_call_operand.hbm [shape: f32[8,72], index: 1, kind: output, shape index: {}]
  %s2 = sld [smem:[#allocation0]]
  $region18: #{tpu_custom_call.1} parent=0
    _
  %s4 = ssub.s32 1, %s2
  %s5 = scalar_select 0, %s4, %s2
  $region1: #{tpu_custom_call.1} parent=0
    #allocation2 [shape = 'u8[4096]{0}', space=vmem, size = 0x1000, scoped, tag = 'input window, operand 0, single buffered']
    #allocation3 [shape = 's32[1]{0}', space=sflag, size = 0x4, scoped, tag = 'scoped memory for tpu_custom_call.1']
    #allocation4 [shape = 's32[1]{0}', space=sflag, size = 0x4, scoped, tag = 'scoped memory for tpu_custom_call.1']
    #allocation5 [shape = 'u8[4096]{0}', space=vmem, size = 0x1000, scoped, tag = 'output window, operand 0, single buffered']
    %6 = vsyncpa [#allocation3], 0
    %7 = vsyncpa [#allocation4], 0
    // Predicated region
    $region2: #{tpu_custom_call.1} parent=1 // pred_check
      _
    $region3: #{tpu_custom_call.1} parent=1 // pred_check_branch
      %9 = sbr.rel (0) target = $region5
    $region4: #{tpu_custom_call.1} parent=1 // pred_region
      %s11 = ssub.s32 128, 128
      %12 = vsyncadd [#allocation3], %s11
      %s14 = sshll.u32 [#allocation2], 4
      %s15 = int_to_ptr.vmem [resolvable:$true] %s14
      %17 = dma.hbm_to_vmem [thread:$0]  %s0, 128, %s15, [#allocation3]
    $region5: #{tpu_custom_call.1} parent=1 // pred_fallthru
      _
    // Predicated region
    $region6: #{tpu_custom_call.1} parent=1 // pred_check
      _
    $region7: #{tpu_custom_call.1} parent=1 // pred_check_branch
      %19 = sbr.rel (0) target = $region9
    $region8: #{tpu_custom_call.1} parent=1 // pred_region
      %20 = dma.done [#allocation3], 128
    $region9: #{tpu_custom_call.1} parent=1 // pred_fallthru
      _
    %v21 = vld [vmem:[#allocation2] sm:$0xff]
    %v22 = vlaneseq
    %v23 = vand.u32 %v22, 127
    %v24 = vlaneseq
    %v25 = vshrl.u32 %v24, 7
    %v26 = vadd.s32 %v25, 8
    %v27 = vadd.s32 %v25, 16
    %v28 = vmul.u32 %v25, 3
    %v29 = vmul.u32 %v26, 3
    %v30 = vmul.u32 %v27, 3
    %v31 = vadd.s32 %v28, 1
    %v32 = vadd.s32 %v29, 1
    %v33 = vadd.s32 %v30, 1
    %vm34 = vcmp.eq.s32.totalorder %v23, %v31
    %vm35 = vcmp.eq.s32.totalorder %v23, %v32
    %vm36 = vcmp.eq.s32.totalorder %v23, %v33
    %v37 = vsel %vm34, 1, 0
    %v38 = vsel %vm35, 1, 0
    %v39 = vsel %vm36, 1, 0
    %v40 = vcvt.s32.f32 %v37
    %v41 = vcvt.s32.f32 %v38
    %v42 = vcvt.s32.f32 %v39
    %vm43 = vcmask 195584
    %v45 = vsel %vm43, %v21, 0
    %47 = vmatprep.subr.mxu0 0.0
    %48 = vmatpush1.msra.mxu0 0.0
    %49 = vmatprep.subr.mxu0 0.0
    %50 = vmatpush1.msra.mxu0 0.0
    %51 = vmatprep.subr.mxu0 0.0
    %52 = vmatpush1.msra.mxu0 0.0
    %53 = vmatprep.subr.mxu0 0.0
    %54 = vmatpush1.msra.mxu0 0.0
    %55 = vmatprep.subr.mxu0 0.0
    %56 = vmatpush1.msra.mxu0 0.0
    %57 = vmatprep.subr.mxu0 0.0
    %58 = vmatpush1.msra.mxu0 0.0
    %59 = vmatprep.subr.mxu0 0.0
    %60 = vmatpush1.msra.mxu0 0.0
    %61 = vmatprep.subr.mxu0 0.0
    %62 = vmatpush1.msra.mxu0 0.0
    %63 = vmatprep.subr.mxu0 0.0
    %64 = vmatpush1.msra.mxu0 0.0
    %65 = vmatprep.subr.mxu0 0.0
    %66 = vmatpush1.msra.mxu0 0.0
    %67 = vmatprep.subr.mxu0 0.0
    %68 = vmatpush1.msra.mxu0 0.0
    %69 = vmatprep.subr.mxu0 0.0
    %70 = vmatpush1.msra.mxu0 0.0
    %71 = vmatprep.subr.mxu0 0.0
    %72 = vmatpush1.msra.mxu0 0.0
    %73 = vmatprep.subr.mxu0 0.0
    %74 = vmatpush1.msra.mxu0 %v42
    %75 = vmatprep.subr.mxu0 0.0
    %76 = vmatpush1.msra.mxu0 %v41
    %77 = vmatprep.subr.mxu0 0.0
    %78 = vmatpush1.msra.mxu0 %v40
    %79 = vmatprep.subr.mxu0 0.0
    %80 = vmatpush2.msra.mxu0 0.0
    %81 = vmatprep.subr.mxu0 0.0
    %82 = vmatpush2.msra.mxu0 0.0
    %83 = vmatprep.subr.mxu0 0.0
    %84 = vmatpush2.msra.mxu0 0.0
    %85 = vmatprep.subr.mxu0 0.0
    %86 = vmatpush2.msra.mxu0 0.0
    %87 = vmatprep.subr.mxu0 0.0
    %88 = vmatpush2.msra.mxu0 0.0
    %89 = vmatprep.subr.mxu0 0.0
    %90 = vmatpush2.msra.mxu0 0.0
    %91 = vmatprep.subr.mxu0 0.0
    %92 = vmatpush2.msra.mxu0 0.0
    %93 = vmatprep.subr.mxu0 0.0
    %94 = vmatpush2.msra.mxu0 0.0
    %95 = vmatprep.subr.mxu0 0.0
    %96 = vmatpush2.msra.mxu0 0.0
    %97 = vmatprep.subr.mxu0 0.0
    %98 = vmatpush2.msra.mxu0 0.0
    %99 = vmatprep.subr.mxu0 0.0
    %100 = vmatpush2.msra.mxu0 0.0
    %101 = vmatprep.subr.mxu0 0.0
    %102 = vmatpush2.msra.mxu0 0.0
    %103 = vmatprep.subr.mxu0 0.0
    %104 = vmatpush2.msra.mxu0 0.0
    %105 = vmatprep.subr.mxu0 0.0
    %106 = vmatpush2.msra.mxu0 0.0
    %107 = vmatprep.subr.mxu0 0.0
    %108 = vmatpush2.msra.mxu0 0.0
    %109 = vmatprep.subr.mxu0 0.0
    %110 = vmatpush2.msra.mxu0 0.0
    %111 = vmatprep.mubr.f32.mxu0 0.0
    %112 = vmatmul.mubr.f32.gmra.mxu0 %v45
    %v113 = vpop.f32.mrf.mxu0
    %v114 = vadd.f32 0.0, %v113
    %v115 = vpop.f32.mrf.mxu0
    %116 = vdwg.mxu0
    %vm117 = vcmask 588800
    %118 = vst.msk [vmem:[#allocation5] sm:$0xff] %vm117, %v114
    // Predicated region
    $region10: #{tpu_custom_call.1} parent=1 // pred_check
      _
    $region11: #{tpu_custom_call.1} parent=1 // pred_check_branch
      %120 = sbr.rel (0) target = $region13
    $region12: #{tpu_custom_call.1} parent=1 // pred_region
      %s122 = ssub.s32 128, 128
      %123 = vsyncadd [#allocation4], %s122
      %s125 = sshll.u32 [#allocation5], 4
      %s126 = int_to_ptr.vmem [resolvable:$true] %s125
      %128 = dma.vmem_to_hbm [thread:$0]  %s126, 128, %s1, [#allocation4]
    $region13: #{tpu_custom_call.1} parent=1 // pred_fallthru
      _
    // Predicated region
    $region14: #{tpu_custom_call.1} parent=1 // pred_check
      _
    $region15: #{tpu_custom_call.1} parent=1 // pred_check_branch
      %130 = sbr.rel (0) target = $region17
    $region16: #{tpu_custom_call.1} parent=1 // pred_region
      %131 = dma.done [#allocation4], 128
    $region17: #{tpu_custom_call.1} parent=1 // pred_fallthru
      _
    %132 = vsyncpa [#allocation3], 1
    %133 = vsyncpa [#allocation4], 1

</llo_original>
